<compile_context>
chip_gen: v5e
topology: v5e:2x2
jax: 0.10.0
libtpu: 0.0.40
codegen_flags: <defaults>
</compile_context>

<pallas_src>
import jax
import jax.numpy as jnp
from jax import lax
from jax.experimental import pallas as pl
from jax.experimental.pallas import tpu as pltpu


# ---------------------------------------------------------------------------
# Kernel 1: input projection for both directions in one big matmul.
#   gi = x2d_bf16 @ [W_ih_f | W_ih_b]_bf16 (f32 acc) + [b_f | b_b]_f32
# Per direction the folded bias is [b_ir+b_hr, b_iz+b_hz, b_in].
# ---------------------------------------------------------------------------
def _input_proj_kernel(x_ref, w_ref, b_ref, o_ref):
    o_ref[...] = (
        jnp.dot(x_ref[...], w_ref[...], preferred_element_type=jnp.float32)
        + b_ref[...]
    )


# ---------------------------------------------------------------------------
# Kernel 2: fused fwd+bwd GRU recurrence over one time chunk.
#   gi_f_ref: (TC, B, 3H) forward gate inputs [r_f, z_f, n_f], chunk c.
#   gi_b_ref: (TC, B, 3H) backward gate inputs [r_b, z_b, n_b], chunk nc-1-c;
#             time is reversed in-kernel (index TC-1-i).
#   whh_ref : (2H, 6H) block-diagonal recurrent weights, columns permuted to
#             [r_f | r_b | z_f | z_b | n_f | n_b].
#   bhn_ref : (1, 2H)  [b_hn_f | b_hn_b]  (kept inside r * (.) per GRU defn).
#   out_ref : (B, 2H)  final hidden states; fwd in [:, :H], bwd in [:, H:].
#   h_ref   : (B, 2H)  persistent hidden-state scratch (carried across chunks).
# ---------------------------------------------------------------------------
def _gru_recurrence_kernel(gi_f_ref, gi_b_ref, whh_ref, bhn_ref, out_ref, h_ref):
    c = pl.program_id(0)
    nc = pl.num_programs(0)
    TC = gi_f_ref.shape[0]
    B, H2 = h_ref.shape            # H2 == 2H (both directions lane-concatenated)
    H = H2 // 2

    @pl.when(c == 0)
    def _():
        h_ref[...] = jnp.zeros_like(h_ref)

    # Loop-invariant loads / broadcasts (once per chunk, outside the loop).
    whh = whh_ref[...]                                     # (2H, 6H)
    bhn = jnp.broadcast_to(bhn_ref[...], (B, H2))          # (B, 2H)

    def step(i, h):
        gi_f = gi_f_ref[i]            # (B, 3H)  fwd gates at time c*TC + i
        gi_b = gi_b_ref[TC - 1 - i]   # (B, 3H)  bwd gates at time T-1-(c*TC+i)
        # Single dot: gates come out lane-dense in [r_f r_b | z_f z_b | n_f n_b].
        gh = jnp.dot(h, whh, preferred_element_type=jnp.float32)  # (B, 6H)
        gi_r = jnp.concatenate([gi_f[:, :H],        gi_b[:, :H]],        axis=1)
        gi_z = jnp.concatenate([gi_f[:, H:2 * H],   gi_b[:, H:2 * H]],   axis=1)
        gi_n = jnp.concatenate([gi_f[:, 2 * H:],    gi_b[:, 2 * H:]],    axis=1)
        r = jax.nn.sigmoid(gi_r + gh[:, :H2])
        z = jax.nn.sigmoid(gi_z + gh[:, H2:2 * H2])
        n = jnp.tanh(gi_n + r * (gh[:, 2 * H2:] + bhn))
        return (1.0 - z) * n + z * h

    h = lax.fori_loop(0, TC, step, h_ref[...], unroll=8)
    h_ref[...] = h                    # carry across chunks

    @pl.when(c == nc - 1)
    def _():
        out_ref[...] = h              # one unmasked lane-dense (B, 2H) store


def _pick_time_chunk(T, target=64):
    """Largest divisor of T that is <= target (keeps the time grid exact)."""
    if T <= target:
        return T
    for tc in range(target, 0, -1):
        if T % tc == 0:
            return tc
    return 1


def _pick_row_block(rows, target=512):
    """Largest divisor of `rows` <= target that is a multiple of 8 (or rows)."""
    if rows <= target:
        return rows
    for rb in range(target, 0, -1):
        if rows % rb == 0 and rb % 8 == 0:
            return rb
    return rows


def pack_params(params, hidden_dim):
    """Fold / permute raw per-direction GRU params into the kernel layout."""
    H = hidden_dim

    def fold_bias(bih, bhh):  # (1, 3H) -> (1, 3H); r,z hh-biases folded in
        return jnp.concatenate(
            [bih[:, :H] + bhh[:, :H],
             bih[:, H:2 * H] + bhh[:, H:2 * H],
             bih[:, 2 * H:]], axis=1)

    whh_f, whh_b = params["whh_f"], params["whh_b"]
    Z = jnp.zeros((H, H), jnp.float32)

    def blk(g):  # gate g in {0:r, 1:z, 2:n} -> (2H, 2H) block-diag [[Wg_f,0],[0,Wg_b]]
        return jnp.concatenate(
            [jnp.concatenate([whh_f[:, g * H:(g + 1) * H], Z], axis=1),
             jnp.concatenate([Z, whh_b[:, g * H:(g + 1) * H]], axis=1)], axis=0)

    whh_bd = jnp.concatenate([blk(0), blk(1), blk(2)], axis=1)   # (2H, 6H)

    return {
        # (D, 6H), bf16 for the MXU-native projection:
        "wih_cat": jnp.concatenate(
            [params["wih_f"], params["wih_b"]], axis=1).astype(jnp.bfloat16),
        # (1, 6H) folded biases, kept f32:
        "bias_cat": jnp.concatenate(
            [fold_bias(params["bih_f"], params["bhh_f"]),
             fold_bias(params["bih_b"], params["bhh_b"])], axis=1),
        # (2H, 6H) block-diagonal recurrent weights, f32:
        "whh_bd": whh_bd,
        # (1, 2H) [b_hn_f | b_hn_b], f32:
        "bhn_cat": jnp.concatenate(
            [params["bhh_f"][:, 2 * H:], params["bhh_b"][:, 2 * H:]], axis=1),
    }


def document_encoder_forward(x, packed, hidden_dim, time_chunk=64):
    """x: (B, T, D) float32 (batch_first). Returns (B, 2H) float32."""
    B, T, D = x.shape
    H = hidden_dim
    vmem_params = dict(vmem_limit_bytes=32 * 1024 * 1024)

    # ---- Phase 1: one large input projection for both directions -----------
    # Time-major rows so the phase-2 recurrence indexes time on the untiled
    # leading dim; operands cast to bf16 (f32 accumulation in the kernel).
    x2d = jnp.transpose(x, (1, 0, 2)).reshape(T * B, D).astype(jnp.bfloat16)
    rows = T * B
    RB = _pick_row_block(rows, 512)
    gi_full = pl.pallas_call(
        _input_proj_kernel,
        out_shape=jax.ShapeDtypeStruct((rows, 6 * H), jnp.float32),
        grid=(rows // RB,),
        in_specs=[pl.BlockSpec((RB, D), lambda r: (r, 0)),
                  pl.BlockSpec((D, 6 * H), lambda r: (0, 0)),
                  pl.BlockSpec((1, 6 * H), lambda r: (0, 0))],
        out_specs=pl.BlockSpec((RB, 6 * H), lambda r: (r, 0)),
        compiler_params=pltpu.CompilerParams(
            dimension_semantics=("parallel",), **vmem_params),
    )(x2d, packed["wih_cat"], packed["bias_cat"])

    # Zero-copy view: (T, B, 6H); fwd gate inputs in cols [:3H], bwd in [3H:].
    gi3 = gi_full.reshape(T, B, 6 * H)

    # ---- Phase 2: fused fwd+bwd recurrence, streamed over time chunks ------
    TC = _pick_time_chunk(T, time_chunk)
    nc = T // TC

    out = pl.pallas_call(
        _gru_recurrence_kernel,
        out_shape=jax.ShapeDtypeStruct((B, 2 * H), jnp.float32),
        grid=(nc,),
        in_specs=[
            # forward gate inputs: chunk c, columns [0:3H)
            pl.BlockSpec((TC, B, 3 * H), lambda c: (c, 0, 0)),
            # backward gate inputs: chunk nc-1-c, columns [3H:6H)
            pl.BlockSpec((TC, B, 3 * H), lambda c: (nc - 1 - c, 0, 1)),
            pl.BlockSpec((2 * H, 6 * H), lambda c: (0, 0)),
            pl.BlockSpec((1, 2 * H), lambda c: (0, 0)),
        ],
        out_specs=pl.BlockSpec((B, 2 * H), lambda c: (0, 0)),
        scratch_shapes=[pltpu.VMEM((B, 2 * H), jnp.float32)],
        compiler_params=pltpu.CompilerParams(
            dimension_semantics=("arbitrary",), **vmem_params),
    )(gi3, gi3, packed["whh_bd"], packed["bhn_cat"])

    return out


def _gru_reference(x, params, H):
    """Pure-JAX f32 reference implementing nn.GRU(bidirectional=True) final states."""
    def run_dir(x_seq, wih, whh, bih, bhh):
        B = x_seq.shape[0]

        def step(h, x_t):
            gi = x_t @ wih + bih
            gh = h @ whh + bhh
            r = jax.nn.sigmoid(gi[:, :H] + gh[:, :H])
            z = jax.nn.sigmoid(gi[:, H:2 * H] + gh[:, H:2 * H])
            n = jnp.tanh(gi[:, 2 * H:] + r * gh[:, 2 * H:])
            return (1.0 - z) * n + z * h, None

        h0 = jnp.zeros((B, H), jnp.float32)
        hT, _ = lax.scan(step, h0, jnp.swapaxes(x_seq, 0, 1))
        return hT

    hf = run_dir(x, params["wih_f"], params["whh_f"], params["bih_f"], params["bhh_f"])
    hb = run_dir(x[:, ::-1, :], params["wih_b"], params["whh_b"],
                 params["bih_b"], params["bhh_b"])
    return jnp.concatenate([hf, hb], axis=1)


def init_params(key, input_dim, hidden_dim):
    """nn.GRU-style init: U(-1/sqrt(H), 1/sqrt(H)); weights pre-transposed for x @ W."""
    H = hidden_dim
    bound = 1.0 / jnp.sqrt(jnp.float32(H))
    keys = jax.random.split(key, 8)

    def u(k, shape):
        return jax.random.uniform(k, shape, jnp.float32, -bound, bound)

    return {
        "wih_f": u(keys[0], (input_dim, 3 * H)),
        "whh_f": u(keys[1], (H, 3 * H)),
        "bih_f": u(keys[2], (1, 3 * H)),
        "bhh_f": u(keys[3], (1, 3 * H)),
        "wih_b": u(keys[4], (input_dim, 3 * H)),
        "whh_b": u(keys[5], (H, 3 * H)),
        "bih_b": u(keys[6], (1, 3 * H)),
        "bhh_b": u(keys[7], (1, 3 * H)),
    }


if __name__ == "__main__":
    # Small shapes consistent with the module (hidden_dim=128 in the spec);
    # x is (batch, max_sentences, sentence_embed_dim).
    B, T, D, H = 2, 32, 128, 128

    key = jax.random.PRNGKey(0)
    k_x, k_p = jax.random.split(key)
    x = jax.random.normal(k_x, (B, T, D), jnp.float32)
    params = init_params(k_p, D, H)
    packed = pack_params(params, H)

    # time_chunk=16 -> 2 chunks, so the cross-chunk hidden-state carry is exercised.
    out = document_encoder_forward(x, packed, H, time_chunk=16)
    out = jax.block_until_ready(out)

    ref = _gru_reference(x, params, H)
    assert out.shape == (B, 2 * H), out.shape
    # bf16 projection operands -> relaxed tolerance vs the f32 reference.
    max_err = float(jnp.max(jnp.abs(out - ref)))
    assert jnp.allclose(out, ref, atol=2e-2, rtol=2e-2), (
        f"mismatch vs JAX reference (max abs err {max_err})")

    print("KERNEL_OK")
</pallas_src>

<mosaic_0001>
module attributes {stable_mosaic.version = 11 : i64} {
  func.func @_input_proj_kernel(%arg0: i32, %arg1: memref<64x128xbf16, #tpu.memory_space<vmem>>, %arg2: memref<128x768xbf16, #tpu.memory_space<vmem>>, %arg3: memref<1x768xf32, #tpu.memory_space<vmem>>, %arg4: memref<64x768xf32, #tpu.memory_space<vmem>>) attributes {dimension_semantics = [#tpu.dimension_semantics<parallel>], iteration_bounds = array<i64: 1>, scalar_prefetch = 0 : i64, scratch_operands = 0 : i64, tpu.core_type = #tpu.core_type<tc>, window_params = [{transform_indices = @transform_0, window_bounds = array<i64: 64, 128>}, {pipeline_mode = #tpu.pipeline_mode<synchronous>, transform_indices = @transform_1, window_bounds = array<i64: 128, 768>}, {pipeline_mode = #tpu.pipeline_mode<synchronous>, transform_indices = @transform_2, window_bounds = array<i64: 1, 768>}, {transform_indices = @transform_3, window_bounds = array<i64: 64, 768>}]} {
    %c0 = arith.constant 0 : index
    %c0_0 = arith.constant 0 : index
    %0 = vector.load %arg1[%c0, %c0_0] : memref<64x128xbf16, #tpu.memory_space<vmem>>, vector<64x128xbf16>
    %c0_1 = arith.constant 0 : index
    %c0_2 = arith.constant 0 : index
    %1 = vector.load %arg2[%c0_1, %c0_2] : memref<128x768xbf16, #tpu.memory_space<vmem>>, vector<128x768xbf16>
    %cst = arith.constant dense<0.000000e+00> : vector<64x768xf32>
    %2 = tpu.matmul %0, %1, %cst {dimension_numbers = #tpu.dot_dimension_numbers<[1], [0], [0], [1], [0, 0, 1, 1], [], []>} : vector<64x128xbf16>, vector<128x768xbf16>, vector<64x768xf32> -> vector<64x768xf32>
    %c0_3 = arith.constant 0 : index
    %c0_4 = arith.constant 0 : index
    %3 = vector.load %arg3[%c0_3, %c0_4] : memref<1x768xf32, #tpu.memory_space<vmem>>, vector<1x768xf32>
    %4 = vector.broadcast %3 : vector<1x768xf32> to vector<64x768xf32>
    %5 = arith.addf %2, %4 : vector<64x768xf32>
    %c0_5 = arith.constant 0 : index
    %c0_6 = arith.constant 0 : index
    %6 = vector.load %arg4[%c0_5, %c0_6] : memref<64x768xf32, #tpu.memory_space<vmem>>, vector<64x768xf32>
    tpu.vector_store %arg4[%c0_5, %c0_6], %5 {strides = array<i32>} : memref<64x768xf32, #tpu.memory_space<vmem>>, vector<64x768xf32>,
    return
  }
  func.func @transform_0(%arg0: i32) -> (i32, i32) {
    %c0_i32 = arith.constant 0 : i32
    %c0_i32_0 = arith.constant 0 : i32
    return %arg0, %c0_i32 : i32, i32
  }
  func.func @transform_1(%arg0: i32) -> (i32, i32) {
    %c0_i32 = arith.constant 0 : i32
    %c0_i32_0 = arith.constant 0 : i32
    %c0_i32_1 = arith.constant 0 : i32
    return %c0_i32, %c0_i32_0 : i32, i32
  }
  func.func @transform_2(%arg0: i32) -> (i32, i32) {
    %c0_i32 = arith.constant 0 : i32
    %c0_i32_0 = arith.constant 0 : i32
    %c0_i32_1 = arith.constant 0 : i32
    return %c0_i32, %c0_i32_0 : i32, i32
  }
  func.func @transform_3(%arg0: i32) -> (i32, i32) {
    %c0_i32 = arith.constant 0 : i32
    %c0_i32_0 = arith.constant 0 : i32
    return %arg0, %c0_i32 : i32, i32
  }
}

</mosaic_0001>

<llo_original>
// kernel: tpu_custom_call.1
$region0: #{tpu_custom_call.1}
  #allocation0 [shape = 'u32[]', space=smem, size = 0x4, offset = 0x4, fixed_abs, tag = 'smem constant byte address 0x4 - core index']
  #allocation1 [shape = 'u32[72,128]{1,0:T(1,128)}', space=vmem, size = 0x9000, scoped, tag = 'internal scratch']
  %s0 = inlined_call_operand.hbm [shape: bf16[64,128], index: 0, kind: input, shape index: {}]
  %s1 = inlined_call_operand.hbm [shape: bf16[128,768], index: 1, kind: input, shape index: {}]
  %s2 = inlined_call_operand.hbm [shape: f32[1,768], index: 2, kind: input, shape index: {}]
  %s3 = inlined_call_operand.hbm [shape: f32[64,768], index: 3, kind: output, shape index: {}]
  %s4 = sld [smem:[#allocation0]]
  $region34: #{tpu_custom_call.1} parent=0
    _
  %s6 = ssub.s32 1, %s4
  %s7 = scalar_select 0, %s6, %s4
  $region1: #{tpu_custom_call.1} parent=0
    #allocation2 [shape = 'u8[16384]{0}', space=vmem, size = 0x4000, scoped, tag = 'input window, operand 0, single buffered']
    #allocation3 [shape = 's32[1]{0}', space=sflag, size = 0x4, scoped, tag = 'scoped memory for tpu_custom_call.1']
    #allocation4 [shape = 's32[1]{0}', space=sflag, size = 0x4, scoped, tag = 'scoped memory for tpu_custom_call.1']
    #allocation5 [shape = 'u8[196608]{0}', space=vmem, size = 0x30000, scoped, tag = 'input window, operand 1, single buffered']
    #allocation6 [shape = 's32[1]{0}', space=sflag, size = 0x4, scoped, tag = 'scoped memory for tpu_custom_call.1']
    #allocation7 [shape = 'u8[3072]{0}', space=vmem, size = 0xc00, scoped, tag = 'input window, operand 2, single buffered']
    #allocation8 [shape = 'u8[196608]{0}', space=vmem, size = 0x30000, scoped, tag = 'output window, operand 0, single buffered']
    %8 = vsyncpa [#allocation3], 0
    %9 = vsyncpa [#allocation6], 0
    %10 = vsyncpa [#allocation4], 0
    // Predicated region
    $region2: #{tpu_custom_call.1} parent=1 // pred_check
      _
    $region3: #{tpu_custom_call.1} parent=1 // pred_check_branch
      %12 = sbr.rel (0) target = $region5
    $region4: #{tpu_custom_call.1} parent=1 // pred_region
      %14 = vsyncadd [#allocation3], 0
      %s15 = sshll.u32 %s0, 4
      %s16 = int_to_ptr.hbm [resolvable:$true] %s15
      %s17 = sshll.u32 [#allocation2], 4
      %s18 = int_to_ptr.vmem [resolvable:$true] %s17
      %23 = dma.hbm_to_vmem [thread:$0]  %s16, 512, %s18, [#allocation3], 64, 64, 4
    $region5: #{tpu_custom_call.1} parent=1 // pred_fallthru
      _
    // Predicated region
    $region6: #{tpu_custom_call.1} parent=1 // pred_check
      _
    $region7: #{tpu_custom_call.1} parent=1 // pred_check_branch
      %25 = sbr.rel (0) target = $region9
    $region8: #{tpu_custom_call.1} parent=1 // pred_region
      %27 = vsyncadd [#allocation6], 0
      %s28 = sshll.u32 %s1, 4
      %s29 = int_to_ptr.hbm [resolvable:$true] %s28
      %s30 = sshll.u32 [#allocation5], 4
      %s31 = int_to_ptr.vmem [resolvable:$true] %s30
      %36 = dma.hbm_to_vmem [thread:$0]  %s29, 6144, %s31, [#allocation6], 384, 384, 24
    $region9: #{tpu_custom_call.1} parent=1 // pred_fallthru
      _
    // Predicated region
    $region10: #{tpu_custom_call.1} parent=1 // pred_check
      _
    $region11: #{tpu_custom_call.1} parent=1 // pred_check_branch
      %38 = sbr.rel (0) target = $region13
    $region12: #{tpu_custom_call.1} parent=1 // pred_region
      %40 = vsyncadd [#allocation6], 0
      %s42 = sshll.u32 %s2, 4
      %s43 = int_to_ptr.hbm [resolvable:$true] %s42
      %s44 = sshll.u32 [#allocation7], 4
      %s45 = int_to_ptr.vmem [resolvable:$true] %s44
      %47 = dma.hbm_to_vmem [thread:$0]  %s43, 96, %s45, [#allocation6]
    $region13: #{tpu_custom_call.1} parent=1 // pred_fallthru
      _
    // Predicated region
    $region14: #{tpu_custom_call.1} parent=1 // pred_check
      _
    $region15: #{tpu_custom_call.1} parent=1 // pred_check_branch
      %49 = sbr.rel (0) target = $region17
    $region16: #{tpu_custom_call.1} parent=1 // pred_region
      %51 = dma.done [#allocation3], 512
    $region17: #{tpu_custom_call.1} parent=1 // pred_fallthru
      _
    // Predicated region
    $region18: #{tpu_custom_call.1} parent=1 // pred_check
      _
    $region19: #{tpu_custom_call.1} parent=1 // pred_check_branch
      %53 = sbr.rel (0) target = $region21
    $region20: #{tpu_custom_call.1} parent=1 // pred_region
      %55 = dma.done [#allocation6], 6144
    $region21: #{tpu_custom_call.1} parent=1 // pred_fallthru
      _
    // Predicated region
    $region22: #{tpu_custom_call.1} parent=1 // pred_check
      _
    $region23: #{tpu_custom_call.1} parent=1 // pred_check_branch
      %57 = sbr.rel (0) target = $region25
    $region24: #{tpu_custom_call.1} parent=1 // pred_region
      %59 = dma.done [#allocation6], 96
    $region25: #{tpu_custom_call.1} parent=1 // pred_fallthru
      _
    %v60 = vld [vmem:[#allocation2] sm:$0xf]
    %v61 = vld [vmem:[#allocation2 + $0x4] sm:$0xf]
    %v62 = vld [vmem:[#allocation2 + $0x8] sm:$0xf]
    %v63 = vld [vmem:[#allocation2 + $0xc] sm:$0xf]
    %v64 = vld [vmem:[#allocation2 + $0x10] sm:$0xf]
    %v65 = vld [vmem:[#allocation2 + $0x14] sm:$0xf]
    %v66 = vld [vmem:[#allocation2 + $0x18] sm:$0xf]
    %v67 = vld [vmem:[#allocation2 + $0x1c] sm:$0xf]
    %v68 = vld [vmem:[#allocation5] sm:$0xff]
    %v69 = vld [vmem:[#allocation5 + $0x8] sm:$0xff]
    %v70 = vld [vmem:[#allocation5 + $0x10] sm:$0xff]
    %v71 = vld [vmem:[#allocation5 + $0x18] sm:$0xff]
    %v72 = vld [vmem:[#allocation5 + $0x20] sm:$0xff]
    %v73 = vld [vmem:[#allocation5 + $0x28] sm:$0xff]
    %v74 = vld [vmem:[#allocation5 + $0x30] sm:$0xff]
    %v75 = vld [vmem:[#allocation5 + $0x38] sm:$0xff]
    %v76 = vld [vmem:[#allocation5 + $0x40] sm:$0xff]
    %v77 = vld [vmem:[#allocation5 + $0x48] sm:$0xff]
    %v78 = vld [vmem:[#allocation5 + $0x50] sm:$0xff]
    %v79 = vld [vmem:[#allocation5 + $0x58] sm:$0xff]
    %v80 = vld [vmem:[#allocation5 + $0x60] sm:$0xff]
    %v81 = vld [vmem:[#allocation5 + $0x68] sm:$0xff]
    %v82 = vld [vmem:[#allocation5 + $0x70] sm:$0xff]
    %v83 = vld [vmem:[#allocation5 + $0x78] sm:$0xff]
    %v84 = vld [vmem:[#allocation5 + $0x80] sm:$0xff]
    %v85 = vld [vmem:[#allocation5 + $0x88] sm:$0xff]
    %v86 = vld [vmem:[#allocation5 + $0x90] sm:$0xff]
    %v87 = vld [vmem:[#allocation5 + $0x98] sm:$0xff]
    %v88 = vld [vmem:[#allocation5 + $0xa0] sm:$0xff]
    %v89 = vld [vmem:[#allocation5 + $0xa8] sm:$0xff]
    %v90 = vld [vmem:[#allocation5 + $0xb0] sm:$0xff]
    %v91 = vld [vmem:[#allocation5 + $0xb8] sm:$0xff]
    %v92 = vld [vmem:[#allocation5 + $0xc0] sm:$0xff]
    %v93 = vld [vmem:[#allocation5 + $0xc8] sm:$0xff]
    %v94 = vld [vmem:[#allocation5 + $0xd0] sm:$0xff]
    %v95 = vld [vmem:[#allocation5 + $0xd8] sm:$0xff]
    %v96 = vld [vmem:[#allocation5 + $0xe0] sm:$0xff]
    %v97 = vld [vmem:[#allocation5 + $0xe8] sm:$0xff]
    %v98 = vld [vmem:[#allocation5 + $0xf0] sm:$0xff]
    %v99 = vld [vmem:[#allocation5 + $0xf8] sm:$0xff]
    %v100 = vld [vmem:[#allocation5 + $0x100] sm:$0xff]
    %v101 = vld [vmem:[#allocation5 + $0x108] sm:$0xff]
    %v102 = vld [vmem:[#allocation5 + $0x110] sm:$0xff]
    %v103 = vld [vmem:[#allocation5 + $0x118] sm:$0xff]
    %v104 = vld [vmem:[#allocation5 + $0x120] sm:$0xff]
    %v105 = vld [vmem:[#allocation5 + $0x128] sm:$0xff]
    %v106 = vld [vmem:[#allocation5 + $0x130] sm:$0xff]
    %v107 = vld [vmem:[#allocation5 + $0x138] sm:$0xff]
    %v108 = vld [vmem:[#allocation5 + $0x140] sm:$0xff]
    %v109 = vld [vmem:[#allocation5 + $0x148] sm:$0xff]
    %v110 = vld [vmem:[#allocation5 + $0x150] sm:$0xff]
    %v111 = vld [vmem:[#allocation5 + $0x158] sm:$0xff]
    %v112 = vld [vmem:[#allocation5 + $0x160] sm:$0xff]
    %v113 = vld [vmem:[#allocation5 + $0x168] sm:$0xff]
    %v114 = vld [vmem:[#allocation5 + $0x170] sm:$0xff]
    %v115 = vld [vmem:[#allocation5 + $0x178] sm:$0xff]
    %v116 = vld [vmem:[#allocation7] sm:$0x3f]
    %v118 = vperm.slane %v116, 0
    %v119 = vperm.slane %v116, 1
    %v120 = vperm.slane %v116, 2
    %v121 = vperm.slane %v116, 3
    %v122 = vperm.slane %v116, 4
    %v123 = vperm.slane %v116, 5
    %v138 = vunpack.c.l.b16 %v60
    %v139 = vunpack.c.l.b16 %v61
    %v140 = vunpack.c.l.b16 %v62
    %v141 = vunpack.c.l.b16 %v63
    %v142 = vunpack.c.l.b16 %v64
    %v143 = vunpack.c.l.b16 %v65
    %v144 = vunpack.c.l.b16 %v66
    %v145 = vunpack.c.l.b16 %v67
    %v146 = vpack.c.b16 %v139, %v138
    %v147 = vpack.c.b16 %v141, %v140
    %v148 = vpack.c.b16 %v143, %v142
    %v149 = vpack.c.b16 %v145, %v144
    %v202 = vunpack.c.l.b16 %v68
    %v203 = vunpack.c.h.b16 %v68
    %v204 = vunpack.c.l.b16 %v69
    %v205 = vunpack.c.h.b16 %v69
    %v206 = vunpack.c.l.b16 %v70
    %v207 = vunpack.c.h.b16 %v70
    %v208 = vunpack.c.l.b16 %v71
    %v209 = vunpack.c.h.b16 %v71
    %v210 = vunpack.c.l.b16 %v72
    %v211 = vunpack.c.h.b16 %v72
    %v212 = vunpack.c.l.b16 %v73
    %v213 = vunpack.c.h.b16 %v73
    %v214 = vunpack.c.l.b16 %v74
    %v215 = vunpack.c.h.b16 %v74
    %v216 = vunpack.c.l.b16 %v75
    %v217 = vunpack.c.h.b16 %v75
    %v218 = vunpack.c.l.b16 %v76
    %v219 = vunpack.c.h.b16 %v76
    %v220 = vunpack.c.l.b16 %v77
    %v221 = vunpack.c.h.b16 %v77
    %v222 = vunpack.c.l.b16 %v78
    %v223 = vunpack.c.h.b16 %v78
    %v224 = vunpack.c.l.b16 %v79
    %v225 = vunpack.c.h.b16 %v79
    %v226 = vunpack.c.l.b16 %v80
    %v227 = vunpack.c.h.b16 %v80
    %v228 = vunpack.c.l.b16 %v81
    %v229 = vunpack.c.h.b16 %v81
    %v230 = vunpack.c.l.b16 %v82
    %v231 = vunpack.c.h.b16 %v82
    %v232 = vunpack.c.l.b16 %v83
    %v233 = vunpack.c.h.b16 %v83
    %v234 = vunpack.c.l.b16 %v84
    %v235 = vunpack.c.h.b16 %v84
    %v236 = vunpack.c.l.b16 %v85
    %v237 = vunpack.c.h.b16 %v85
    %v238 = vunpack.c.l.b16 %v86
    %v239 = vunpack.c.h.b16 %v86
    %v240 = vunpack.c.l.b16 %v87
    %v241 = vunpack.c.h.b16 %v87
    %v242 = vunpack.c.l.b16 %v88
    %v243 = vunpack.c.h.b16 %v88
    %v244 = vunpack.c.l.b16 %v89
    %v245 = vunpack.c.h.b16 %v89
    %v246 = vunpack.c.l.b16 %v90
    %v247 = vunpack.c.h.b16 %v90
    %v248 = vunpack.c.l.b16 %v91
    %v249 = vunpack.c.h.b16 %v91
    %v250 = vunpack.c.l.b16 %v92
    %v251 = vunpack.c.h.b16 %v92
    %v252 = vunpack.c.l.b16 %v93
    %v253 = vunpack.c.h.b16 %v93
    %v254 = vunpack.c.l.b16 %v94
    %v255 = vunpack.c.h.b16 %v94
    %v256 = vunpack.c.l.b16 %v95
    %v257 = vunpack.c.h.b16 %v95
    %v258 = vunpack.c.l.b16 %v96
    %v259 = vunpack.c.h.b16 %v96
    %v260 = vunpack.c.l.b16 %v97
    %v261 = vunpack.c.h.b16 %v97
    %v262 = vunpack.c.l.b16 %v98
    %v263 = vunpack.c.h.b16 %v98
    %v264 = vunpack.c.l.b16 %v99
    %v265 = vunpack.c.h.b16 %v99
    %v266 = vunpack.c.l.b16 %v100
    %v267 = vunpack.c.h.b16 %v100
    %v268 = vunpack.c.l.b16 %v101
    %v269 = vunpack.c.h.b16 %v101
    %v270 = vunpack.c.l.b16 %v102
    %v271 = vunpack.c.h.b16 %v102
    %v272 = vunpack.c.l.b16 %v103
    %v273 = vunpack.c.h.b16 %v103
    %v274 = vunpack.c.l.b16 %v104
    %v275 = vunpack.c.h.b16 %v104
    %v276 = vunpack.c.l.b16 %v105
    %v277 = vunpack.c.h.b16 %v105
    %v278 = vunpack.c.l.b16 %v106
    %v279 = vunpack.c.h.b16 %v106
    %v280 = vunpack.c.l.b16 %v107
    %v281 = vunpack.c.h.b16 %v107
    %v282 = vunpack.c.l.b16 %v108
    %v283 = vunpack.c.h.b16 %v108
    %v284 = vunpack.c.l.b16 %v109
    %v285 = vunpack.c.h.b16 %v109
    %v286 = vunpack.c.l.b16 %v110
    %v287 = vunpack.c.h.b16 %v110
    %v288 = vunpack.c.l.b16 %v111
    %v289 = vunpack.c.h.b16 %v111
    %v290 = vunpack.c.l.b16 %v112
    %v291 = vunpack.c.h.b16 %v112
    %v292 = vunpack.c.l.b16 %v113
    %v293 = vunpack.c.h.b16 %v113
    %v294 = vunpack.c.l.b16 %v114
    %v295 = vunpack.c.h.b16 %v114
    %v296 = vunpack.c.l.b16 %v115
    %v297 = vunpack.c.h.b16 %v115
    %v298 = vpack.c.b16 %v208, %v202
    %v299 = vpack.c.b16 %v209, %v203
    %v300 = vpack.c.b16 %v210, %v204
    %v301 = vpack.c.b16 %v211, %v205
    %v302 = vpack.c.b16 %v212, %v206
    %v303 = vpack.c.b16 %v213, %v207
    %v304 = vpack.c.b16 %v220, %v214
    %v305 = vpack.c.b16 %v221, %v215
    %v306 = vpack.c.b16 %v222, %v216
    %v307 = vpack.c.b16 %v223, %v217
    %v308 = vpack.c.b16 %v224, %v218
    %v309 = vpack.c.b16 %v225, %v219
    %v310 = vpack.c.b16 %v232, %v226
    %v311 = vpack.c.b16 %v233, %v227
    %v312 = vpack.c.b16 %v234, %v228
    %v313 = vpack.c.b16 %v235, %v229
    %v314 = vpack.c.b16 %v236, %v230
    %v315 = vpack.c.b16 %v237, %v231
    %v316 = vpack.c.b16 %v244, %v238
    %v317 = vpack.c.b16 %v245, %v239
    %v318 = vpack.c.b16 %v246, %v240
    %v319 = vpack.c.b16 %v247, %v241
    %v320 = vpack.c.b16 %v248, %v242
    %v321 = vpack.c.b16 %v249, %v243
    %v322 = vpack.c.b16 %v256, %v250
    %v323 = vpack.c.b16 %v257, %v251
    %v324 = vpack.c.b16 %v258, %v252
    %v325 = vpack.c.b16 %v259, %v253
    %v326 = vpack.c.b16 %v260, %v254
    %v327 = vpack.c.b16 %v261, %v255
    %v328 = vpack.c.b16 %v268, %v262
    %v329 = vpack.c.b16 %v269, %v263
    %v330 = vpack.c.b16 %v270, %v264
    %v331 = vpack.c.b16 %v271, %v265
    %v332 = vpack.c.b16 %v272, %v266
    %v333 = vpack.c.b16 %v273, %v267
    %v334 = vpack.c.b16 %v280, %v274
    %v335 = vpack.c.b16 %v281, %v275
    %v336 = vpack.c.b16 %v282, %v276
    %v337 = vpack.c.b16 %v283, %v277
    %v338 = vpack.c.b16 %v284, %v278
    %v339 = vpack.c.b16 %v285, %v279
    %v340 = vpack.c.b16 %v292, %v286
    %v341 = vpack.c.b16 %v293, %v287
    %v342 = vpack.c.b16 %v294, %v288
    %v343 = vpack.c.b16 %v295, %v289
    %v344 = vpack.c.b16 %v296, %v290
    %v345 = vpack.c.b16 %v297, %v291
    %394 = vmatpush.bf16.msra.mxu0 %v340
    %395 = vmatpush.bf16.msra.mxu0 %v334
    %396 = vmatpush.bf16.msra.mxu0 %v328
    %397 = vmatpush.bf16.msra.mxu0 %v322
    %398 = vmatpush.bf16.msra.mxu0 %v316
    %399 = vmatpush.bf16.msra.mxu0 %v310
    %400 = vmatpush.bf16.msra.mxu0 %v304
    %401 = vmatpush.bf16.msra.mxu0 %v298
    %402 = vmatmul.bf16.gmra.mxu0 %v146
    %v403 = vpop.f32.mrf.mxu0
    %v404 = vadd.f32 %v118, %v403
    %v405 = vpop.f32.mrf.mxu0
    %v406 = vadd.f32 %v118, %v405
    %407 = vmatmul.bf16.gmra.mxu0 %v147
    %v408 = vpop.f32.mrf.mxu0
    %v409 = vadd.f32 %v118, %v408
    %v410 = vpop.f32.mrf.mxu0
    %v411 = vadd.f32 %v118, %v410
    %412 = vmatmul.bf16.gmra.mxu0 %v148
    %v413 = vpop.f32.mrf.mxu0
    %v414 = vadd.f32 %v118, %v413
    %v415 = vpop.f32.mrf.mxu0
    %v416 = vadd.f32 %v118, %v415
    %417 = vmatmul.bf16.gmra.mxu0 %v149
    %v418 = vpop.f32.mrf.mxu0
    %v419 = vadd.f32 %v118, %v418
    %v420 = vpop.f32.mrf.mxu0
    %v421 = vadd.f32 %v118, %v420
    %422 = vdwg.mxu0
    %423 = vmatpush.bf16.msra.mxu0 %v341
    %424 = vmatpush.bf16.msra.mxu0 %v335
    %425 = vmatpush.bf16.msra.mxu0 %v329
    %426 = vmatpush.bf16.msra.mxu0 %v323
    %427 = vmatpush.bf16.msra.mxu0 %v317
    %428 = vmatpush.bf16.msra.mxu0 %v311
    %429 = vmatpush.bf16.msra.mxu0 %v305
    %430 = vmatpush.bf16.msra.mxu0 %v299
    %431 = vmatmul.bf16.gmra.mxu0 %v146
    %v432 = vpop.f32.mrf.mxu0
    %v433 = vadd.f32 %v119, %v432
    %v434 = vpop.f32.mrf.mxu0
    %v435 = vadd.f32 %v119, %v434
    %436 = vmatmul.bf16.gmra.mxu0 %v147
    %v437 = vpop.f32.mrf.mxu0
    %v438 = vadd.f32 %v119, %v437
    %v439 = vpop.f32.mrf.mxu0
    %v440 = vadd.f32 %v119, %v439
    %441 = vmatmul.bf16.gmra.mxu0 %v148
    %v442 = vpop.f32.mrf.mxu0
    %v443 = vadd.f32 %v119, %v442
    %v444 = vpop.f32.mrf.mxu0
    %v445 = vadd.f32 %v119, %v444
    %446 = vmatmul.bf16.gmra.mxu0 %v149
    %v447 = vpop.f32.mrf.mxu0
    %v448 = vadd.f32 %v119, %v447
    %v449 = vpop.f32.mrf.mxu0
    %v450 = vadd.f32 %v119, %v449
    %451 = vdwg.mxu0
    %452 = vmatpush.bf16.msra.mxu0 %v342
    %453 = vmatpush.bf16.msra.mxu0 %v336
    %454 = vmatpush.bf16.msra.mxu0 %v330
    %455 = vmatpush.bf16.msra.mxu0 %v324
    %456 = vmatpush.bf16.msra.mxu0 %v318
    %457 = vmatpush.bf16.msra.mxu0 %v312
    %458 = vmatpush.bf16.msra.mxu0 %v306
    %459 = vmatpush.bf16.msra.mxu0 %v300
    %460 = vmatmul.bf16.gmra.mxu0 %v146
    %v461 = vpop.f32.mrf.mxu0
    %v462 = vadd.f32 %v120, %v461
    %v463 = vpop.f32.mrf.mxu0
    %v464 = vadd.f32 %v120, %v463
    %465 = vmatmul.bf16.gmra.mxu0 %v147
    %v466 = vpop.f32.mrf.mxu0
    %v467 = vadd.f32 %v120, %v466
    %v468 = vpop.f32.mrf.mxu0
    %v469 = vadd.f32 %v120, %v468
    %470 = vmatmul.bf16.gmra.mxu0 %v148
    %v471 = vpop.f32.mrf.mxu0
    %v472 = vadd.f32 %v120, %v471
    %v473 = vpop.f32.mrf.mxu0
    %v474 = vadd.f32 %v120, %v473
    %475 = vmatmul.bf16.gmra.mxu0 %v149
    %v476 = vpop.f32.mrf.mxu0
    %v477 = vadd.f32 %v120, %v476
    %v478 = vpop.f32.mrf.mxu0
    %v479 = vadd.f32 %v120, %v478
    %480 = vdwg.mxu0
    %481 = vmatpush.bf16.msra.mxu0 %v343
    %482 = vmatpush.bf16.msra.mxu0 %v337
    %483 = vmatpush.bf16.msra.mxu0 %v331
    %484 = vmatpush.bf16.msra.mxu0 %v325
    %485 = vmatpush.bf16.msra.mxu0 %v319
    %486 = vmatpush.bf16.msra.mxu0 %v313
    %487 = vmatpush.bf16.msra.mxu0 %v307
    %488 = vmatpush.bf16.msra.mxu0 %v301
    %489 = vmatmul.bf16.gmra.mxu0 %v146
    %v490 = vpop.f32.mrf.mxu0
    %v491 = vadd.f32 %v121, %v490
    %v492 = vpop.f32.mrf.mxu0
    %v493 = vadd.f32 %v121, %v492
    %494 = vmatmul.bf16.gmra.mxu0 %v147
    %v495 = vpop.f32.mrf.mxu0
    %v496 = vadd.f32 %v121, %v495
    %v497 = vpop.f32.mrf.mxu0
    %v498 = vadd.f32 %v121, %v497
    %499 = vmatmul.bf16.gmra.mxu0 %v148
    %v500 = vpop.f32.mrf.mxu0
    %v501 = vadd.f32 %v121, %v500
    %v502 = vpop.f32.mrf.mxu0
    %v503 = vadd.f32 %v121, %v502
    %504 = vmatmul.bf16.gmra.mxu0 %v149
    %v505 = vpop.f32.mrf.mxu0
    %v506 = vadd.f32 %v121, %v505
    %v507 = vpop.f32.mrf.mxu0
    %v508 = vadd.f32 %v121, %v507
    %509 = vdwg.mxu0
    %510 = vmatpush.bf16.msra.mxu0 %v344
    %511 = vmatpush.bf16.msra.mxu0 %v338
    %512 = vmatpush.bf16.msra.mxu0 %v332
    %513 = vmatpush.bf16.msra.mxu0 %v326
    %514 = vmatpush.bf16.msra.mxu0 %v320
    %515 = vmatpush.bf16.msra.mxu0 %v314
    %516 = vmatpush.bf16.msra.mxu0 %v308
    %517 = vmatpush.bf16.msra.mxu0 %v302
    %518 = vmatmul.bf16.gmra.mxu0 %v146
    %v519 = vpop.f32.mrf.mxu0
    %v520 = vadd.f32 %v122, %v519
    %v521 = vpop.f32.mrf.mxu0
    %v522 = vadd.f32 %v122, %v521
    %523 = vmatmul.bf16.gmra.mxu0 %v147
    %v524 = vpop.f32.mrf.mxu0
    %v525 = vadd.f32 %v122, %v524
    %v526 = vpop.f32.mrf.mxu0
    %v527 = vadd.f32 %v122, %v526
    %528 = vmatmul.bf16.gmra.mxu0 %v148
    %v529 = vpop.f32.mrf.mxu0
    %v530 = vadd.f32 %v122, %v529
    %v531 = vpop.f32.mrf.mxu0
    %v532 = vadd.f32 %v122, %v531
    %533 = vmatmul.bf16.gmra.mxu0 %v149
    %v534 = vpop.f32.mrf.mxu0
    %v535 = vadd.f32 %v122, %v534
    %v536 = vpop.f32.mrf.mxu0
    %v537 = vadd.f32 %v122, %v536
    %538 = vdwg.mxu0
    %539 = vmatpush.bf16.msra.mxu0 %v345
    %540 = vmatpush.bf16.msra.mxu0 %v339
    %541 = vmatpush.bf16.msra.mxu0 %v333
    %542 = vmatpush.bf16.msra.mxu0 %v327
    %543 = vmatpush.bf16.msra.mxu0 %v321
    %544 = vmatpush.bf16.msra.mxu0 %v315
    %545 = vmatpush.bf16.msra.mxu0 %v309
    %546 = vmatpush.bf16.msra.mxu0 %v303
    %547 = vmatmul.bf16.gmra.mxu0 %v146
    %v548 = vpop.f32.mrf.mxu0
    %v549 = vadd.f32 %v123, %v548
    %v550 = vpop.f32.mrf.mxu0
    %v551 = vadd.f32 %v123, %v550
    %552 = vmatmul.bf16.gmra.mxu0 %v147
    %v553 = vpop.f32.mrf.mxu0
    %v554 = vadd.f32 %v123, %v553
    %v555 = vpop.f32.mrf.mxu0
    %v556 = vadd.f32 %v123, %v555
    %557 = vmatmul.bf16.gmra.mxu0 %v148
    %v558 = vpop.f32.mrf.mxu0
    %v559 = vadd.f32 %v123, %v558
    %v560 = vpop.f32.mrf.mxu0
    %v561 = vadd.f32 %v123, %v560
    %562 = vmatmul.bf16.gmra.mxu0 %v149
    %v563 = vpop.f32.mrf.mxu0
    %v564 = vadd.f32 %v123, %v563
    %v565 = vpop.f32.mrf.mxu0
    %v566 = vadd.f32 %v123, %v565
    %567 = vdwg.mxu0
    %568 = vst [vmem:[#allocation8] sm:$0xff] %v404
    %569 = vst [vmem:[#allocation8 + $0x8] sm:$0xff] %v433
    %570 = vst [vmem:[#allocation8 + $0x10] sm:$0xff] %v462
    %571 = vst [vmem:[#allocation8 + $0x18] sm:$0xff] %v491
    %572 = vst [vmem:[#allocation8 + $0x20] sm:$0xff] %v520
    %573 = vst [vmem:[#allocation8 + $0x28] sm:$0xff] %v549
    %574 = vst [vmem:[#allocation8 + $0x30] sm:$0xff] %v406
    %575 = vst [vmem:[#allocation8 + $0x38] sm:$0xff] %v435
    %576 = vst [vmem:[#allocation8 + $0x40] sm:$0xff] %v464
    %577 = vst [vmem:[#allocation8 + $0x48] sm:$0xff] %v493
    %578 = vst [vmem:[#allocation8 + $0x50] sm:$0xff] %v522
    %579 = vst [vmem:[#allocation8 + $0x58] sm:$0xff] %v551
    %580 = vst [vmem:[#allocation8 + $0x60] sm:$0xff] %v409
    %581 = vst [vmem:[#allocation8 + $0x68] sm:$0xff] %v438
    %582 = vst [vmem:[#allocation8 + $0x70] sm:$0xff] %v467
    %583 = vst [vmem:[#allocation8 + $0x78] sm:$0xff] %v496
    %584 = vst [vmem:[#allocation8 + $0x80] sm:$0xff] %v525
    %585 = vst [vmem:[#allocation8 + $0x88] sm:$0xff] %v554
    %586 = vst [vmem:[#allocation8 + $0x90] sm:$0xff] %v411
    %587 = vst [vmem:[#allocation8 + $0x98] sm:$0xff] %v440
    %588 = vst [vmem:[#allocation8 + $0xa0] sm:$0xff] %v469
    %589 = vst [vmem:[#allocation8 + $0xa8] sm:$0xff] %v498
    %590 = vst [vmem:[#allocation8 + $0xb0] sm:$0xff] %v527
    %591 = vst [vmem:[#allocation8 + $0xb8] sm:$0xff] %v556
    %592 = vst [vmem:[#allocation8 + $0xc0] sm:$0xff] %v414
    %593 = vst [vmem:[#allocation8 + $0xc8] sm:$0xff] %v443
    %594 = vst [vmem:[#allocation8 + $0xd0] sm:$0xff] %v472
    %595 = vst [vmem:[#allocation8 + $0xd8] sm:$0xff] %v501
    %596 = vst [vmem:[#allocation8 + $0xe0] sm:$0xff] %v530
    %597 = vst [vmem:[#allocation8 + $0xe8] sm:$0xff] %v559
    %598 = vst [vmem:[#allocation8 + $0xf0] sm:$0xff] %v416
    %599 = vst [vmem:[#allocation8 + $0xf8] sm:$0xff] %v445
    %600 = vst [vmem:[#allocation8 + $0x100] sm:$0xff] %v474
    %601 = vst [vmem:[#allocation8 + $0x108] sm:$0xff] %v503
    %602 = vst [vmem:[#allocation8 + $0x110] sm:$0xff] %v532
    %603 = vst [vmem:[#allocation8 + $0x118] sm:$0xff] %v561
    %604 = vst [vmem:[#allocation8 + $0x120] sm:$0xff] %v419
    %605 = vst [vmem:[#allocation8 + $0x128] sm:$0xff] %v448
    %606 = vst [vmem:[#allocation8 + $0x130] sm:$0xff] %v477
    %607 = vst [vmem:[#allocation8 + $0x138] sm:$0xff] %v506
    %608 = vst [vmem:[#allocation8 + $0x140] sm:$0xff] %v535
    %609 = vst [vmem:[#allocation8 + $0x148] sm:$0xff] %v564
    %610 = vst [vmem:[#allocation8 + $0x150] sm:$0xff] %v421
    %611 = vst [vmem:[#allocation8 + $0x158] sm:$0xff] %v450
    %612 = vst [vmem:[#allocation8 + $0x160] sm:$0xff] %v479
    %613 = vst [vmem:[#allocation8 + $0x168] sm:$0xff] %v508
    %614 = vst [vmem:[#allocation8 + $0x170] sm:$0xff] %v537
    %615 = vst [vmem:[#allocation8 + $0x178] sm:$0xff] %v566
    // Predicated region
    $region26: #{tpu_custom_call.1} parent=1 // pred_check
      _
    $region27: #{tpu_custom_call.1} parent=1 // pred_check_branch
      %617 = sbr.rel (0) target = $region29
    $region28: #{tpu_custom_call.1} parent=1 // pred_region
      %619 = vsyncadd [#allocation4], 0
      %s620 = sshll.u32 [#allocation8], 4
      %s621 = int_to_ptr.vmem [resolvable:$true] %s620
      %s622 = sshll.u32 %s3, 4
      %s623 = int_to_ptr.hbm [resolvable:$true] %s622
      %628 = dma.vmem_to_hbm [thread:$0]  %s621, 6144, %s623, [#allocation4], 768, 768, 48
    $region29: #{tpu_custom_call.1} parent=1 // pred_fallthru
      _
    // Predicated region
    $region30: #{tpu_custom_call.1} parent=1 // pred_check
      _
    $region31: #{tpu_custom_call.1} parent=1 // pred_check_branch
      %630 = sbr.rel (0) target = $region33
    $region32: #{tpu_custom_call.1} parent=1 // pred_region
      %632 = dma.done [#allocation4], 6144
    $region33: #{tpu_custom_call.1} parent=1 // pred_fallthru
      _
    %633 = vsyncpa [#allocation3], 1
    %634 = vsyncpa [#allocation6], 1
    %635 = vsyncpa [#allocation4], 1

</llo_original>
